<compile_context>
chip_gen: v5e
topology: v5e:2x2
jax: 0.10.0
libtpu: 0.0.40
codegen_flags: <defaults>
</compile_context>

<pallas_src>
import functools

import jax
import jax.numpy as jnp
from jax import lax
from jax.experimental import pallas as pl
from jax.experimental.pallas import tpu as pltpu


_LANE = 512                        # lane-dense slab width (multiple of 128)
_VMEM_BUDGET = 20 * 1024 * 1024    # target for double-buffered blocks
_VMEM_LIMIT = 32 * 1024 * 1024     # explicit scoped-VMEM limit (fits v7x too)


def _cdiv(a, b):
    return -(-a // b)


def _bce_elementwise(x, t, w, logits):
    """Elementwise binary cross entropy matching torch semantics (f32)."""
    if logits:
        # Numerically-stable BCE-with-logits: max(x,0) - x*t + log1p(exp(-|x|))
        bce = jnp.maximum(x, 0.0) - x * t + jnp.log1p(jnp.exp(-jnp.abs(x)))
    else:
        # torch.binary_cross_entropy clamps log outputs at -100.
        log_p = jnp.maximum(jnp.log(x), -100.0)
        log_1mp = jnp.maximum(jnp.log(1.0 - x), -100.0)
        bce = -(t * log_p + (1.0 - t) * log_1mp)
    if w is not None:
        bce = bce * w
    return bce


def _focal_from_bce(bce, alpha, gamma):
    """alpha * (1 - exp(-bce))**gamma * bce, with an integer-gamma fast path."""
    pt = jnp.exp(-bce)
    one_m_pt = jnp.maximum(1.0 - pt, 0.0)
    g = float(gamma)
    if g == int(g) and 0 <= int(g) <= 4:
        gi = int(g)
        if gi == 0:
            mod = jnp.ones_like(one_m_pt)
        else:
            mod = one_m_pt
            for _ in range(gi - 1):
                mod = mod * one_m_pt
    else:
        mod = jnp.power(one_m_pt, g)
    return alpha * mod * bce


def _focal_reduce_kernel(*refs, alpha, gamma, logits, has_weight,
                         tile_rows, lane, total_n, needs_mask):
    if has_weight:
        x_ref, t_ref, w_ref, o_ref, acc_ref = refs
    else:
        x_ref, t_ref, o_ref, acc_ref = refs
        w_ref = None

    s = pl.program_id(0)      # partial-sum split ("parallel")
    i = pl.program_id(1)      # reduction steps within split ("arbitrary")

    @pl.when(i == 0)
    def _():
        acc_ref[...] = jnp.zeros_like(acc_ref)

    x = x_ref[...].astype(jnp.float32)
    t = t_ref[...].astype(jnp.float32)
    w = w_ref[...].astype(jnp.float32) if has_weight else None

    bce = _bce_elementwise(x, t, w, logits)
    f_loss = _focal_from_bce(bce, alpha, gamma)

    if needs_mask:
        # Exact masking of padded tail elements (static flag; no cost when
        # the input size already tiles evenly).
        tile0 = (s * pl.num_programs(1) + i) * tile_rows
        r = lax.broadcasted_iota(jnp.int32, (tile_rows, lane), 0)
        c = lax.broadcasted_iota(jnp.int32, (tile_rows, lane), 1)
        flat = (tile0 + r) * lane + c
        f_loss = jnp.where(flat < total_n, f_loss, 0.0)

    # Vector accumulation: pure VPU adds into an (8, lane) accumulator.
    if tile_rows == 8:
        acc_ref[...] += f_loss
    else:
        acc_ref[...] += f_loss.reshape(tile_rows // 8, 8, lane).sum(axis=0)

    @pl.when(i == pl.num_programs(1) - 1)
    def _():
        o_ref[...] = acc_ref[...]


def _focal_elementwise_kernel(*refs, alpha, gamma, logits, has_weight):
    if has_weight:
        x_ref, t_ref, w_ref, o_ref = refs
    else:
        x_ref, t_ref, o_ref = refs
        w_ref = None

    x = x_ref[...].astype(jnp.float32)
    t = t_ref[...].astype(jnp.float32)
    w = w_ref[...].astype(jnp.float32) if has_weight else None

    bce = _bce_elementwise(x, t, w, logits)
    o_ref[...] = _focal_from_bce(bce, alpha, gamma).astype(o_ref.dtype)


def focal_loss(inputs, targets, weight=None, *,
               alpha=0.25, gamma=2.0, logits=False, reduce=True,
               lane=_LANE):
    """JAX/Pallas equivalent of FocalLoss.forward."""
    orig_shape = inputs.shape
    total_n = int(inputs.size)
    has_weight = weight is not None
    out_dtype = (inputs.dtype if jnp.issubdtype(inputs.dtype, jnp.floating)
                 else jnp.float32)

    # Number of HBM streams per element (for VMEM-budgeted tile sizing).
    n_streams = 2 + (1 if has_weight else 0) + (0 if reduce else 1)

    rows = _cdiv(total_n, lane)
    budget_rows = _VMEM_BUDGET // (2 * n_streams * lane * 4)
    tile_rows = max(8, (budget_rows // 8) * 8)
    tile_rows = min(tile_rows, ((rows + 7) // 8) * 8)

    steps_total = _cdiv(rows, tile_rows)
    # Produce 2 partial sums when there is enough work so the reduction can
    # be split across the 2 TensorCores on v7x (harmless on v5e/v6e).
    n_splits = 2 if (reduce and steps_total >= 2) else 1
    steps_per_split = _cdiv(steps_total, n_splits)
    rows_padded = n_splits * steps_per_split * tile_rows
    padded_total = rows_padded * lane
    needs_mask = padded_total != total_n

    def _slab(a):
        flat = jnp.ravel(a)
        pad = padded_total - total_n
        if pad:
            flat = jnp.pad(flat, (0, pad))
        return flat.reshape(rows_padded, lane)

    operands = [_slab(inputs), _slab(targets)]
    if has_weight:
        operands.append(_slab(jnp.broadcast_to(weight, orig_shape)))

    if reduce:
        kernel = functools.partial(
            _focal_reduce_kernel, alpha=float(alpha), gamma=gamma,
            logits=bool(logits), has_weight=has_weight, tile_rows=tile_rows,
            lane=lane, total_n=total_n, needs_mask=needs_mask)
        in_specs = [
            pl.BlockSpec((tile_rows, lane),
                         lambda s, i: (s * steps_per_split + i, 0))
            for _ in operands
        ]
        partial_sums = pl.pallas_call(
            kernel,
            out_shape=jax.ShapeDtypeStruct((n_splits * 8, lane), jnp.float32),
            grid_spec=pltpu.PrefetchScalarGridSpec(
                num_scalar_prefetch=0,
                grid=(n_splits, steps_per_split),
                in_specs=in_specs,
                out_specs=pl.BlockSpec((8, lane), lambda s, i: (s, 0)),
                scratch_shapes=[pltpu.VMEM((8, lane), jnp.float32)],
            ),
            compiler_params=pltpu.CompilerParams(
                dimension_semantics=("parallel", "arbitrary"),
                vmem_limit_bytes=_VMEM_LIMIT),
        )(*operands)
        # Final tiny cross-lane reduce + mean in the wrapper.
        return jnp.sum(partial_sums) / jnp.float32(total_n)
    else:
        kernel = functools.partial(
            _focal_elementwise_kernel, alpha=float(alpha), gamma=gamma,
            logits=bool(logits), has_weight=has_weight)
        in_specs = [pl.BlockSpec((tile_rows, lane), lambda i: (i, 0))
                    for _ in operands]
        out = pl.pallas_call(
            kernel,
            out_shape=jax.ShapeDtypeStruct((rows_padded, lane), out_dtype),
            grid_spec=pltpu.PrefetchScalarGridSpec(
                num_scalar_prefetch=0,
                grid=(steps_total,),
                in_specs=in_specs,
                out_specs=pl.BlockSpec((tile_rows, lane), lambda i: (i, 0)),
            ),
            compiler_params=pltpu.CompilerParams(
                dimension_semantics=("parallel",),
                vmem_limit_bytes=_VMEM_LIMIT),
        )(*operands)
        out_flat = out.reshape(-1)
        if padded_total != total_n:
            out_flat = out_flat[:total_n]
        return out_flat.reshape(orig_shape)


def _focal_loss_ref(inputs, targets, weight=None, *,
                    alpha=0.25, gamma=2.0, logits=False, reduce=True):
    """Pure-JAX reference for validation."""
    x = inputs.astype(jnp.float32)
    t = targets.astype(jnp.float32)
    w = None if weight is None else jnp.broadcast_to(
        weight, x.shape).astype(jnp.float32)
    bce = _bce_elementwise(x, t, w, logits)
    fl = _focal_from_bce(bce, alpha, gamma)
    return jnp.mean(fl) if reduce else fl


if __name__ == "__main__":
    key = jax.random.PRNGKey(0)
    k1, k2, k3, k4 = jax.random.split(key, 4)

    # Shapes consistent with a typical NCHW prediction map.
    B, C, H, W = 2, 4, 16, 16

    # Default FocalLoss has logits=False -> inputs must be probabilities.
    probs = jax.random.uniform(k1, (B, C, H, W), jnp.float32,
                               minval=1e-4, maxval=1.0 - 1e-4)
    targets = (jax.random.uniform(k2, (B, C, H, W), jnp.float32) > 0.5
               ).astype(jnp.float32)

    # reduce=True (default): scalar mean focal loss.
    loss = focal_loss(probs, targets, alpha=0.25, gamma=2,
                      logits=False, reduce=True)
    loss = jax.block_until_ready(loss)
    ref = _focal_loss_ref(probs, targets, alpha=0.25, gamma=2,
                          logits=False, reduce=True)
    assert jnp.allclose(loss, ref, rtol=2e-5, atol=1e-6), (loss, ref)

    # reduce=False path (elementwise focal loss map).
    fmap = focal_loss(probs, targets, alpha=0.25, gamma=2,
                      logits=False, reduce=False)
    fmap = jax.block_until_ready(fmap)
    fmap_ref = _focal_loss_ref(probs, targets, alpha=0.25, gamma=2,
                               logits=False, reduce=False)
    assert jnp.allclose(fmap, fmap_ref, rtol=2e-5, atol=1e-6)

    # logits=True with a per-channel weight exercises the weighted kernel.
    logit_in = jax.random.normal(k3, (B, C, H, W), jnp.float32)
    weight = jax.random.uniform(k4, (1, C, 1, 1), jnp.float32,
                                minval=0.5, maxval=1.5)
    loss_w = focal_loss(logit_in, targets, weight, alpha=0.25, gamma=2,
                        logits=True, reduce=True)
    loss_w = jax.block_until_ready(loss_w)
    ref_w = _focal_loss_ref(logit_in, targets, weight, alpha=0.25, gamma=2,
                            logits=True, reduce=True)
    assert jnp.allclose(loss_w, ref_w, rtol=2e-5, atol=1e-6), (loss_w, ref_w)

    print("KERNEL_OK")
</pallas_src>

<mosaic_0001>
module attributes {stable_mosaic.version = 11 : i64} {
  func.func @_focal_reduce_kernel(%arg0: i32, %arg1: i32, %arg2: memref<8x512xf32, #tpu.memory_space<vmem>>, %arg3: memref<8x512xf32, #tpu.memory_space<vmem>>, %arg4: memref<8x512xf32, #tpu.memory_space<vmem>>, %arg5: memref<8x512xf32, #tpu.memory_space<vmem>>) attributes {dimension_semantics = [#tpu.dimension_semantics<parallel>, #tpu.dimension_semantics<arbitrary>], iteration_bounds = array<i64: 1, 1>, scalar_prefetch = 0 : i64, scratch_operands = 1 : i64, tpu.core_type = #tpu.core_type<tc>, window_params = [{transform_indices = @transform_0, window_bounds = array<i64: 8, 512>}, {transform_indices = @transform_1, window_bounds = array<i64: 8, 512>}, {transform_indices = @transform_2, window_bounds = array<i64: 8, 512>}]} {
    %c0_i32 = arith.constant 0 : i32
    %0 = arith.cmpi eq, %arg1, %c0_i32 : i32
    %1 = arith.extui %0 : i1 to i32
    %c0_i32_0 = arith.constant 0 : i32
    %2 = arith.cmpi ne, %1, %c0_i32_0 : i32
    scf.if %2 {
      %cst_19 = arith.constant 0.000000e+00 : f32
      %51 = vector.broadcast %cst_19 : f32 to vector<8x512xf32>
      %c0_20 = arith.constant 0 : index
      %c0_21 = arith.constant 0 : index
      %52 = vector.load %arg5[%c0_20, %c0_21] : memref<8x512xf32, #tpu.memory_space<vmem>>, vector<8x512xf32>
      tpu.vector_store %arg5[%c0_20, %c0_21], %51 {strides = array<i32>} : memref<8x512xf32, #tpu.memory_space<vmem>>, vector<8x512xf32>,
    } else {
    }
    %c0 = arith.constant 0 : index
    %c0_1 = arith.constant 0 : index
    %3 = vector.load %arg2[%c0, %c0_1] : memref<8x512xf32, #tpu.memory_space<vmem>>, vector<8x512xf32>
    %c0_2 = arith.constant 0 : index
    %c0_3 = arith.constant 0 : index
    %4 = vector.load %arg3[%c0_2, %c0_3] : memref<8x512xf32, #tpu.memory_space<vmem>>, vector<8x512xf32>
    %5 = math.log %3 : vector<8x512xf32>
    %cst = arith.constant -1.000000e+02 : f32
    %6 = vector.broadcast %cst : f32 to vector<8x512xf32>
    %7 = arith.maximumf %5, %6 : vector<8x512xf32>
    %cst_4 = arith.constant 1.000000e+00 : f32
    %8 = vector.broadcast %cst_4 : f32 to vector<8x512xf32>
    %9 = arith.subf %8, %3 : vector<8x512xf32>
    %10 = math.log %9 : vector<8x512xf32>
    %cst_5 = arith.constant -1.000000e+02 : f32
    %11 = vector.broadcast %cst_5 : f32 to vector<8x512xf32>
    %12 = arith.maximumf %10, %11 : vector<8x512xf32>
    %13 = arith.mulf %4, %7 : vector<8x512xf32>
    %cst_6 = arith.constant 1.000000e+00 : f32
    %14 = vector.broadcast %cst_6 : f32 to vector<8x512xf32>
    %15 = arith.subf %14, %4 : vector<8x512xf32>
    %16 = arith.mulf %15, %12 : vector<8x512xf32>
    %17 = arith.addf %13, %16 : vector<8x512xf32>
    %cst_7 = arith.constant 0.000000e+00 : f32
    %18 = vector.broadcast %cst_7 : f32 to vector<8x512xf32>
    %19 = arith.subf %18, %17 : vector<8x512xf32>
    %cst_8 = arith.constant 0.000000e+00 : f32
    %20 = vector.broadcast %cst_8 : f32 to vector<8x512xf32>
    %21 = arith.subf %20, %19 : vector<8x512xf32>
    %22 = math.exp %21 : vector<8x512xf32>
    %cst_9 = arith.constant 1.000000e+00 : f32
    %23 = vector.broadcast %cst_9 : f32 to vector<8x512xf32>
    %24 = arith.subf %23, %22 : vector<8x512xf32>
    %cst_10 = arith.constant 0.000000e+00 : f32
    %25 = vector.broadcast %cst_10 : f32 to vector<8x512xf32>
    %26 = arith.maximumf %24, %25 : vector<8x512xf32>
    %27 = arith.mulf %26, %26 : vector<8x512xf32>
    %cst_11 = arith.constant 2.500000e-01 : f32
    %28 = vector.broadcast %cst_11 : f32 to vector<8x512xf32>
    %29 = arith.mulf %28, %27 : vector<8x512xf32>
    %30 = arith.mulf %29, %19 : vector<8x512xf32>
    %c1_i32 = arith.constant 1 : i32
    %31 = arith.muli %arg0, %c1_i32 : i32
    %32 = arith.addi %31, %arg1 : i32
    %c8_i32 = arith.constant 8 : i32
    %33 = arith.muli %32, %c8_i32 : i32
    %34 = tpu.iota {dimensions = array<i32: 0>} : vector<8x512xi32>
    %35 = tpu.iota {dimensions = array<i32: 1>} : vector<8x512xi32>
    %36 = vector.broadcast %33 : i32 to vector<8x512xi32>
    %37 = arith.addi %36, %34 : vector<8x512xi32>
    %c512_i32 = arith.constant 512 : i32
    %38 = vector.broadcast %c512_i32 : i32 to vector<8x512xi32>
    %39 = arith.muli %37, %38 : vector<8x512xi32>
    %40 = arith.addi %39, %35 : vector<8x512xi32>
    %c2048_i32 = arith.constant 2048 : i32
    %41 = vector.broadcast %c2048_i32 : i32 to vector<8x512xi32>
    %42 = arith.cmpi slt, %40, %41 : vector<8x512xi32>
    %cst_12 = arith.constant 0.000000e+00 : f32
    %43 = vector.broadcast %cst_12 : f32 to vector<8x512xf32>
    %44 = arith.select %42, %30, %43 : vector<8x512xi1>, vector<8x512xf32>
    %c0_13 = arith.constant 0 : index
    %c0_14 = arith.constant 0 : index
    %45 = vector.load %arg5[%c0_13, %c0_14] : memref<8x512xf32, #tpu.memory_space<vmem>>, vector<8x512xf32>
    %46 = arith.addf %45, %44 : vector<8x512xf32>
    %c0_15 = arith.constant 0 : index
    %c0_16 = arith.constant 0 : index
    %47 = vector.load %arg5[%c0_15, %c0_16] : memref<8x512xf32, #tpu.memory_space<vmem>>, vector<8x512xf32>
    tpu.vector_store %arg5[%c0_15, %c0_16], %46 {strides = array<i32>} : memref<8x512xf32, #tpu.memory_space<vmem>>, vector<8x512xf32>,
    %c0_i32_17 = arith.constant 0 : i32
    %48 = arith.cmpi eq, %arg1, %c0_i32_17 : i32
    %49 = arith.extui %48 : i1 to i32
    %c0_i32_18 = arith.constant 0 : i32
    %50 = arith.cmpi ne, %49, %c0_i32_18 : i32
    scf.if %50 {
      %c0_19 = arith.constant 0 : index
      %c0_20 = arith.constant 0 : index
      %51 = vector.load %arg5[%c0_19, %c0_20] : memref<8x512xf32, #tpu.memory_space<vmem>>, vector<8x512xf32>
      %c0_21 = arith.constant 0 : index
      %c0_22 = arith.constant 0 : index
      %52 = vector.load %arg4[%c0_21, %c0_22] : memref<8x512xf32, #tpu.memory_space<vmem>>, vector<8x512xf32>
      tpu.vector_store %arg4[%c0_21, %c0_22], %51 {strides = array<i32>} : memref<8x512xf32, #tpu.memory_space<vmem>>, vector<8x512xf32>,
    } else {
    }
    return
  }
  func.func @transform_0(%arg0: i32, %arg1: i32) -> (i32, i32) {
    %c1_i32 = arith.constant 1 : i32
    %0 = arith.muli %arg0, %c1_i32 : i32
    %1 = arith.addi %0, %arg1 : i32
    %c0_i32 = arith.constant 0 : i32
    %c0_i32_0 = arith.constant 0 : i32
    return %1, %c0_i32 : i32, i32
  }
  func.func @transform_1(%arg0: i32, %arg1: i32) -> (i32, i32) {
    %c1_i32 = arith.constant 1 : i32
    %0 = arith.muli %arg0, %c1_i32 : i32
    %1 = arith.addi %0, %arg1 : i32
    %c0_i32 = arith.constant 0 : i32
    %c0_i32_0 = arith.constant 0 : i32
    return %1, %c0_i32 : i32, i32
  }
  func.func @transform_2(%arg0: i32, %arg1: i32) -> (i32, i32) {
    %c0_i32 = arith.constant 0 : i32
    %c0_i32_0 = arith.constant 0 : i32
    return %arg0, %c0_i32 : i32, i32
  }
}

</mosaic_0001>

<llo_original>
// kernel: tpu_custom_call.1
$region0: #{tpu_custom_call.1}
  #allocation0 [shape = 'u32[]', space=smem, size = 0x4, offset = 0x4, fixed_abs, tag = 'smem constant byte address 0x4 - core index']
  #allocation1 [shape = 'u32[72,128]{1,0:T(1,128)}', space=vmem, size = 0x9000, scoped, tag = 'internal scratch']
  #allocation2 [shape = 'f32[8,512]{1,0:T(8,128)}', space=vmem, size = 0x4000, scoped, tag = 'scratch operand']
  %s0 = inlined_call_operand.hbm [shape: f32[8,512], index: 0, kind: input, shape index: {}]
  %s1 = inlined_call_operand.hbm [shape: f32[8,512], index: 1, kind: input, shape index: {}]
  %s2 = inlined_call_operand.hbm [shape: f32[8,512], index: 2, kind: output, shape index: {}]
  %s3 = sld [smem:[#allocation0]]
  $region34: #{tpu_custom_call.1} parent=0
    _
  %s5 = ssub.s32 1, %s3
  %s6 = scalar_select 0, %s5, %s3
  $region1: #{tpu_custom_call.1} parent=0
    #allocation3 [shape = 'u8[16384]{0}', space=vmem, size = 0x4000, scoped, tag = 'input window, operand 0, single buffered']
    #allocation4 [shape = 's32[1]{0}', space=sflag, size = 0x4, scoped, tag = 'scoped memory for tpu_custom_call.1']
    #allocation5 [shape = 's32[1]{0}', space=sflag, size = 0x4, scoped, tag = 'scoped memory for tpu_custom_call.1']
    #allocation6 [shape = 'u8[16384]{0}', space=vmem, size = 0x4000, scoped, tag = 'input window, operand 1, single buffered']
    #allocation7 [shape = 's32[1]{0}', space=sflag, size = 0x4, scoped, tag = 'scoped memory for tpu_custom_call.1']
    #allocation8 [shape = 'u8[16384]{0}', space=vmem, size = 0x4000, scoped, tag = 'output window, operand 0, single buffered']
    %7 = vsyncpa [#allocation4], 0
    %8 = vsyncpa [#allocation7], 0
    %9 = vsyncpa [#allocation5], 0
    // Predicated region
    $region2: #{tpu_custom_call.1} parent=1 // pred_check
      _
    $region3: #{tpu_custom_call.1} parent=1 // pred_check_branch
      %11 = sbr.rel (0) target = $region5
    $region4: #{tpu_custom_call.1} parent=1 // pred_region
      %s12 = sadd.s32 0, 0
      %14 = vsyncadd [#allocation4], 0
      %s15 = smul.addr %s12, 4
      %s16 = smul.addr %s15, 8
      %s17 = scalar_lea.hbm %s0, %s16
      %s19 = sshll.u32 %s17, 4
      %s20 = int_to_ptr.hbm [resolvable:$true] %s19
      %s21 = sshll.u32 [#allocation3], 4
      %s22 = int_to_ptr.vmem [resolvable:$true] %s21
      %24 = dma.hbm_to_vmem [thread:$0]  %s20, 512, %s22, [#allocation4]
    $region5: #{tpu_custom_call.1} parent=1 // pred_fallthru
      _
    // Predicated region
    $region6: #{tpu_custom_call.1} parent=1 // pred_check
      _
    $region7: #{tpu_custom_call.1} parent=1 // pred_check_branch
      %26 = sbr.rel (0) target = $region9
    $region8: #{tpu_custom_call.1} parent=1 // pred_region
      %s27 = sadd.s32 0, 0
      %29 = vsyncadd [#allocation7], 0
      %s30 = smul.addr %s27, 4
      %s31 = smul.addr %s30, 8
      %s32 = scalar_lea.hbm %s1, %s31
      %s34 = sshll.u32 %s32, 4
      %s35 = int_to_ptr.hbm [resolvable:$true] %s34
      %s36 = sshll.u32 [#allocation6], 4
      %s37 = int_to_ptr.vmem [resolvable:$true] %s36
      %39 = dma.hbm_to_vmem [thread:$0]  %s35, 512, %s37, [#allocation7]
    $region9: #{tpu_custom_call.1} parent=1 // pred_fallthru
      _
    // Predicated region
    $region10: #{tpu_custom_call.1} parent=1 // pred_check
      _
    $region11: #{tpu_custom_call.1} parent=1 // pred_check_branch
      %41 = sbr.rel (0) target = $region13
    $region12: #{tpu_custom_call.1} parent=1 // pred_region
      %43 = dma.done [#allocation4], 512
    $region13: #{tpu_custom_call.1} parent=1 // pred_fallthru
      _
    // Predicated region
    $region14: #{tpu_custom_call.1} parent=1 // pred_check
      _
    $region15: #{tpu_custom_call.1} parent=1 // pred_check_branch
      %45 = sbr.rel (0) target = $region17
    $region16: #{tpu_custom_call.1} parent=1 // pred_region
      %47 = dma.done [#allocation7], 512
    $region17: #{tpu_custom_call.1} parent=1 // pred_fallthru
      _
    %s48 = sadd.s32 0, 0
    %s49 = sadd.s32 0, 0
    %p50 = scmp.eq.s32.totalorder 0, 0
    // Predicated region
    $region18: #{tpu_custom_call.1} parent=1 // pred_check
      %p51 = pneg %p50
    $region19: #{tpu_custom_call.1} parent=1 // pred_check_branch
      %53 = sbr.rel (%p51) target = $region21
    $region20: #{tpu_custom_call.1} parent=1 // pred_region
      %54 = vst [vmem:[#allocation2] sm:$0xff] 0.0
      %55 = vst [vmem:[#allocation2 + $0x8] sm:$0xff] 0.0
      %56 = vst [vmem:[#allocation2 + $0x10] sm:$0xff] 0.0
      %57 = vst [vmem:[#allocation2 + $0x18] sm:$0xff] 0.0
    $region21: #{tpu_custom_call.1} parent=1 // pred_fallthru
      _
    %v58 = vld [vmem:[#allocation3] sm:$0xff]
    %v59 = vld [vmem:[#allocation3 + $0x8] sm:$0xff]
    %v60 = vld [vmem:[#allocation3 + $0x10] sm:$0xff]
    %v61 = vld [vmem:[#allocation3 + $0x18] sm:$0xff]
    %v62 = vld [vmem:[#allocation6] sm:$0xff]
    %v63 = vld [vmem:[#allocation6 + $0x8] sm:$0xff]
    %v64 = vld [vmem:[#allocation6 + $0x10] sm:$0xff]
    %v65 = vld [vmem:[#allocation6 + $0x18] sm:$0xff]
    %v66 = vlog2.pop %v58
    %v67 = vmul.f32 %v66, 0.6931472
    %v68 = vlog2.pop %v59
    %v69 = vmul.f32 %v68, 0.6931472
    %v70 = vlog2.pop %v60
    %v71 = vmul.f32 %v70, 0.6931472
    %v72 = vlog2.pop %v61
    %v73 = vmul.f32 %v72, 0.6931472
    %v74 = vmax.f32 %v67, -100.0
    %v75 = vmax.f32 %v69, -100.0
    %v76 = vmax.f32 %v71, -100.0
    %v77 = vmax.f32 %v73, -100.0
    %v78 = vsub.f32 1.0, %v58
    %v79 = vsub.f32 1.0, %v59
    %v80 = vsub.f32 1.0, %v60
    %v81 = vsub.f32 1.0, %v61
    %v82 = vlog2.pop %v78
    %v83 = vmul.f32 %v82, 0.6931472
    %v84 = vlog2.pop %v79
    %v85 = vmul.f32 %v84, 0.6931472
    %v86 = vlog2.pop %v80
    %v87 = vmul.f32 %v86, 0.6931472
    %v88 = vlog2.pop %v81
    %v89 = vmul.f32 %v88, 0.6931472
    %v90 = vmax.f32 %v83, -100.0
    %v91 = vmax.f32 %v85, -100.0
    %v92 = vmax.f32 %v87, -100.0
    %v93 = vmax.f32 %v89, -100.0
    %v94 = vmul.f32 %v62, %v74
    %v95 = vmul.f32 %v63, %v75
    %v96 = vmul.f32 %v64, %v76
    %v97 = vmul.f32 %v65, %v77
    %v98 = vsub.f32 1.0, %v62
    %v99 = vsub.f32 1.0, %v63
    %v100 = vsub.f32 1.0, %v64
    %v101 = vsub.f32 1.0, %v65
    %v102 = vmul.f32 %v98, %v90
    %v103 = vmul.f32 %v99, %v91
    %v104 = vmul.f32 %v100, %v92
    %v105 = vmul.f32 %v101, %v93
    %v106 = vadd.f32 %v94, %v102
    %v107 = vadd.f32 %v95, %v103
    %v108 = vadd.f32 %v96, %v104
    %v109 = vadd.f32 %v97, %v105
    %v110 = vsub.f32 0.0, %v106
    %v111 = vsub.f32 0.0, %v107
    %v112 = vsub.f32 0.0, %v108
    %v113 = vsub.f32 0.0, %v109
    %v114 = vsub.f32 0.0, %v110
    %v115 = vsub.f32 0.0, %v111
    %v116 = vsub.f32 0.0, %v112
    %v117 = vsub.f32 0.0, %v113
    %v118 = vmul.f32 %v114, 1.442695
    %v119 = vpow.pop %v118
    %v120 = vmul.f32 %v115, 1.442695
    %v121 = vpow.pop %v120
    %v122 = vmul.f32 %v116, 1.442695
    %v123 = vpow.pop %v122
    %v124 = vmul.f32 %v117, 1.442695
    %v125 = vpow.pop %v124
    %v126 = vsub.f32 1.0, %v119
    %v127 = vsub.f32 1.0, %v121
    %v128 = vsub.f32 1.0, %v123
    %v129 = vsub.f32 1.0, %v125
    %v130 = vmax.f32 %v126, 0.0
    %v131 = vmax.f32 %v127, 0.0
    %v132 = vmax.f32 %v128, 0.0
    %v133 = vmax.f32 %v129, 0.0
    %v134 = vmul.f32 %v130, %v130
    %v135 = vmul.f32 %v131, %v131
    %v136 = vmul.f32 %v132, %v132
    %v137 = vmul.f32 %v133, %v133
    %v138 = vmul.f32 %v134, 0.25
    %v139 = vmul.f32 %v135, 0.25
    %v140 = vmul.f32 %v136, 0.25
    %v141 = vmul.f32 %v137, 0.25
    %v142 = vmul.f32 %v138, %v110
    %v143 = vmul.f32 %v139, %v111
    %v144 = vmul.f32 %v140, %v112
    %v145 = vmul.f32 %v141, %v113
    %s146 = sadd.s32 0, 0
    %s147 = smul.u32 %s146, 8
    %v148 = vlaneseq
    %v149 = vshrl.u32 %v148, 7
    %v150 = vlaneseq
    %v151 = vand.u32 %v150, 127
    %v152 = vadd.s32 %v151, 128
    %v153 = vadd.s32 %v151, 256
    %v154 = vadd.s32 %v151, 384
    %v155 = vstv %s147
    %v156 = vadd.s32 %v155, %v149
    %v157 = vmul.u32 %v156, 512
    %v158 = vadd.s32 %v157, %v151
    %v159 = vadd.s32 %v157, %v152
    %v160 = vadd.s32 %v157, %v153
    %v161 = vadd.s32 %v157, %v154
    %vm162 = vcmp.lt.s32.totalorder %v158, 2048
    %vm163 = vcmp.lt.s32.totalorder %v159, 2048
    %vm164 = vcmp.lt.s32.totalorder %v160, 2048
    %vm165 = vcmp.lt.s32.totalorder %v161, 2048
    %v166 = vsel %vm162, %v142, 0.0
    %v167 = vsel %vm163, %v143, 0.0
    %v168 = vsel %vm164, %v144, 0.0
    %v169 = vsel %vm165, %v145, 0.0
    %v170 = vld [vmem:[#allocation2] sm:$0xff]
    %v171 = vld [vmem:[#allocation2 + $0x8] sm:$0xff]
    %v172 = vld [vmem:[#allocation2 + $0x10] sm:$0xff]
    %v173 = vld [vmem:[#allocation2 + $0x18] sm:$0xff]
    %v174 = vadd.f32 %v170, %v166
    %v175 = vadd.f32 %v171, %v167
    %v176 = vadd.f32 %v172, %v168
    %v177 = vadd.f32 %v173, %v169
    %178 = vst [vmem:[#allocation2] sm:$0xff] %v174
    %179 = vst [vmem:[#allocation2 + $0x8] sm:$0xff] %v175
    %180 = vst [vmem:[#allocation2 + $0x10] sm:$0xff] %v176
    %181 = vst [vmem:[#allocation2 + $0x18] sm:$0xff] %v177
    // Predicated region
    $region22: #{tpu_custom_call.1} parent=1 // pred_check
      %p182 = pneg %p50
    $region23: #{tpu_custom_call.1} parent=1 // pred_check_branch
      %184 = sbr.rel (%p182) target = $region25
    $region24: #{tpu_custom_call.1} parent=1 // pred_region
      %v185 = vld [vmem:[#allocation2] sm:$0xff]
      %v186 = vld [vmem:[#allocation2 + $0x8] sm:$0xff]
      %v187 = vld [vmem:[#allocation2 + $0x10] sm:$0xff]
      %v188 = vld [vmem:[#allocation2 + $0x18] sm:$0xff]
      %189 = vst [vmem:[#allocation8] sm:$0xff] %v185
      %190 = vst [vmem:[#allocation8 + $0x8] sm:$0xff] %v186
      %191 = vst [vmem:[#allocation8 + $0x10] sm:$0xff] %v187
      %192 = vst [vmem:[#allocation8 + $0x18] sm:$0xff] %v188
    $region25: #{tpu_custom_call.1} parent=1 // pred_fallthru
      _
    // Predicated region
    $region26: #{tpu_custom_call.1} parent=1 // pred_check
      _
    $region27: #{tpu_custom_call.1} parent=1 // pred_check_branch
      %194 = sbr.rel (0) target = $region29
    $region28: #{tpu_custom_call.1} parent=1 // pred_region
      %196 = vsyncadd [#allocation5], 0
      %s198 = sshll.u32 [#allocation8], 4
      %s199 = int_to_ptr.vmem [resolvable:$true] %s198
      %s200 = sshll.u32 %s2, 4
      %s201 = int_to_ptr.hbm [resolvable:$true] %s200
      %203 = dma.vmem_to_hbm [thread:$0]  %s199, 512, %s201, [#allocation5]
    $region29: #{tpu_custom_call.1} parent=1 // pred_fallthru
      _
    // Predicated region
    $region30: #{tpu_custom_call.1} parent=1 // pred_check
      _
    $region31: #{tpu_custom_call.1} parent=1 // pred_check_branch
      %205 = sbr.rel (0) target = $region33
    $region32: #{tpu_custom_call.1} parent=1 // pred_region
      %207 = dma.done [#allocation5], 512
    $region33: #{tpu_custom_call.1} parent=1 // pred_fallthru
      _
    %208 = vsyncpa [#allocation4], 1
    %209 = vsyncpa [#allocation7], 1
    %210 = vsyncpa [#allocation5], 1

</llo_original>
